<compile_context>
chip_gen: v5e
topology: v5e:2x2
jax: 0.10.0
libtpu: 0.0.40
codegen_flags: <defaults>
</compile_context>

<pallas_src>
import math

import jax
import jax.numpy as jnp
from jax.experimental import pallas as pl
from jax.experimental.pallas import tpu as pltpu


def _round_up(n, m):
    return ((n + m - 1) // m) * m


def fnn_kernel(x_ref, w1_ref, b1_ref, w2_ref, b2_ref, o_ref):
    # In-kernel f32 -> bf16 cast of the streamed activations (free on the VPU;
    # avoids a separate wrapper-side HBM cast pass over x).
    x = x_ref[...].astype(jnp.bfloat16)
    # hidden = relu(x @ w1 + b1)   (bf16 x bf16 -> f32 accumulate on the MXU)
    h = jnp.dot(x, w1_ref[...], preferred_element_type=jnp.float32)
    h = jnp.maximum(h + b1_ref[...], 0.0)
    # logits = hidden @ w2 + b2    (cast hidden back to bf16 for the MXU)
    out = jnp.dot(h.astype(w2_ref.dtype), w2_ref[...],
                  preferred_element_type=jnp.float32)
    o_ref[...] = (out + b2_ref[...]).astype(o_ref.dtype)


def fnn_forward(x, w1, b1, w2, b2, *, batch_tile=1024, min_grid_steps=1,
                trim_output=True):
    """Fused FNN forward.

    x: [B, D_in] f32; w1: [D_in, H]; b1: [1, H]; w2: [H, C]; b2: [1, C].

    batch_tile:     max rows per grid step (rounded to a multiple of 128).
    min_grid_steps: set to 2 on v7x (megacore) so the "parallel" batch axis has
                    at least 2 steps when B >= 256; leave at 1 on v5e/v6e.
    trim_output:    True  -> return exact [B, C] f32 (nn.Module semantics).
                    False -> return the lane-dense [B, C_pad] bf16 slab (rows
                             already sliced) so a downstream softmax/argmax can
                             consume it without an extra lane-slice copy.
    """
    B, D_in = x.shape
    H = w1.shape[1]
    C = w2.shape[1]

    # ---- lane-dense output: pad classes up to a multiple of 128 (zeros) ----
    C_pad = _round_up(C, 128)
    if C_pad != C:
        w2 = jnp.pad(w2, ((0, 0), (0, C_pad - C)))
        b2 = jnp.pad(b2, ((0, 0), (0, C_pad - C)))

    # ---- batch tiling: big tiles, multiples of 128 (MXU/sublane granularity) ----
    bt = min(batch_tile, _round_up(B, 128))
    if min_grid_steps > 1:
        # v7x megacore: split only when that still leaves >= 128 rows per tile.
        bt_split = max(128, _round_up(pl.cdiv(_round_up(B, 128), min_grid_steps), 128))
        bt = min(bt, bt_split)
    B_pad = _round_up(B, bt)
    if B_pad != B:
        # No-op for B a multiple of bt (the common case).
        x = jnp.pad(x, ((0, B_pad - B), (0, 0)))
    grid = (B_pad // bt,)

    # ---- weights bf16 (tiny, fetched once, VMEM-resident); biases stay f32 ----
    w1 = w1.astype(jnp.bfloat16)
    w2 = w2.astype(jnp.bfloat16)
    b1 = b1.astype(jnp.float32)
    b2 = b2.astype(jnp.float32)
    # NOTE: x stays f32 in HBM; the kernel casts it to bf16 on the fly.

    cost = pl.CostEstimate(
        flops=2 * B_pad * (D_in * H + H * C_pad),
        transcendentals=0,
        bytes_accessed=(B_pad * D_in * 4          # x (f32, streamed)
                        + w1.size * 2 + w2.size * 2   # weights (bf16, once)
                        + b1.size * 4 + b2.size * 4   # biases (f32, once)
                        + B_pad * C_pad * 2),         # logits (bf16 writeback)
    )

    out = pl.pallas_call(
        fnn_kernel,
        out_shape=jax.ShapeDtypeStruct((B_pad, C_pad), jnp.bfloat16),
        grid_spec=pltpu.PrefetchScalarGridSpec(
            num_scalar_prefetch=0,
            grid=grid,
            in_specs=[
                pl.BlockSpec((bt, D_in), lambda i: (i, 0)),      # x tile (streamed f32)
                pl.BlockSpec((D_in, H), lambda i: (0, 0)),       # w1 (resident)
                pl.BlockSpec((1, H), lambda i: (0, 0)),          # b1
                pl.BlockSpec((H, C_pad), lambda i: (0, 0)),      # w2 (resident, 128-padded)
                pl.BlockSpec((1, C_pad), lambda i: (0, 0)),      # b2
            ],
            out_specs=pl.BlockSpec((bt, C_pad), lambda i: (i, 0)),
        ),
        compiler_params=pltpu.CompilerParams(
            dimension_semantics=("parallel",),   # batch axis shards across TCs on v7x
        ),
        cost_estimate=cost,
    )(x, w1, b1, w2, b2)

    if trim_output:
        # Exact nn.Module return: [B, C] f32.  (This lane-slice is a separate
        # XLA copy; pass trim_output=False to hand the padded bf16 slab to a
        # fused consumer instead.)
        return out[:B, :C].astype(jnp.float32)
    return out[:B]


def init_linear_params(key, in_features, out_features):
    """nn.Linear default init: U(-1/sqrt(in), 1/sqrt(in)); weight pre-transposed."""
    k_w, k_b = jax.random.split(key)
    bound = 1.0 / math.sqrt(in_features)
    w = jax.random.uniform(
        k_w, (in_features, out_features), jnp.float32, minval=-bound, maxval=bound
    )
    b = jax.random.uniform(
        k_b, (1, out_features), jnp.float32, minval=-bound, maxval=bound
    )
    return w, b


if __name__ == "__main__":
    # Small task config consistent with the module's __init__.
    image_shape = (1, 16, 16)          # (C, H, W)
    num_classes = 10
    hidden_size = 128
    batch = 256                        # one 256-row tile -> grid=(1,) on v5e/v6e

    d_in = image_shape[0] * image_shape[1] * image_shape[2]

    key = jax.random.PRNGKey(0)
    k_x, k_l1, k_l2 = jax.random.split(key, 3)

    # Input images, NCHW, flattened exactly like prepare()/torch.flatten(start_dim=1).
    x_img = jax.random.normal(k_x, (batch,) + image_shape, dtype=jnp.float32)
    x = x_img.reshape(batch, d_in)

    w1, b1 = init_linear_params(k_l1, d_in, hidden_size)
    w2, b2 = init_linear_params(k_l2, hidden_size, num_classes)

    # Default batch_tile=1024 keeps the whole batch in one tile on single-TC
    # parts; on v7x pass min_grid_steps=2 to use both TensorCores.
    logits = fnn_forward(x, w1, b1, w2, b2)
    logits = jax.block_until_ready(logits)

    # Sanity check against a plain-JAX f32 reference (bf16 matmuls/output -> loose tol).
    ref = jnp.maximum(x @ w1 + b1, 0.0) @ w2 + b2
    assert logits.shape == (batch, num_classes)
    assert jnp.allclose(logits, ref, atol=3e-2, rtol=3e-2)

    print("KERNEL_OK")
</pallas_src>

<mosaic_0001>
module attributes {stable_mosaic.version = 11 : i64} {
  func.func @fnn_kernel(%arg0: i32, %arg1: memref<256x256xf32, #tpu.memory_space<vmem>>, %arg2: memref<256x128xbf16, #tpu.memory_space<vmem>>, %arg3: memref<1x128xf32, #tpu.memory_space<vmem>>, %arg4: memref<128x128xbf16, #tpu.memory_space<vmem>>, %arg5: memref<1x128xf32, #tpu.memory_space<vmem>>, %arg6: memref<256x128xbf16, #tpu.memory_space<vmem>>) attributes {dimension_semantics = [#tpu.dimension_semantics<parallel>], iteration_bounds = array<i64: 1>, scalar_prefetch = 0 : i64, scratch_operands = 0 : i64, tpu.core_type = #tpu.core_type<tc>, window_params = [{transform_indices = @transform_0, window_bounds = array<i64: 256, 256>}, {pipeline_mode = #tpu.pipeline_mode<synchronous>, transform_indices = @transform_1, window_bounds = array<i64: 256, 128>}, {pipeline_mode = #tpu.pipeline_mode<synchronous>, transform_indices = @transform_2, window_bounds = array<i64: 1, 128>}, {pipeline_mode = #tpu.pipeline_mode<synchronous>, transform_indices = @transform_3, window_bounds = array<i64: 128, 128>}, {pipeline_mode = #tpu.pipeline_mode<synchronous>, transform_indices = @transform_4, window_bounds = array<i64: 1, 128>}, {transform_indices = @transform_5, window_bounds = array<i64: 256, 128>}]} {
    %c0 = arith.constant 0 : index
    %c0_0 = arith.constant 0 : index
    %0 = vector.load %arg1[%c0, %c0_0] : memref<256x256xf32, #tpu.memory_space<vmem>>, vector<256x256xf32>
    %1 = arith.truncf %0 : vector<256x256xf32> to vector<256x256xbf16>
    %c0_1 = arith.constant 0 : index
    %c0_2 = arith.constant 0 : index
    %2 = vector.load %arg2[%c0_1, %c0_2] : memref<256x128xbf16, #tpu.memory_space<vmem>>, vector<256x128xbf16>
    %cst = arith.constant dense<0.000000e+00> : vector<256x128xf32>
    %3 = tpu.matmul %1, %2, %cst {dimension_numbers = #tpu.dot_dimension_numbers<[1], [0], [0], [1], [0, 0, 1, 1], [], []>} : vector<256x256xbf16>, vector<256x128xbf16>, vector<256x128xf32> -> vector<256x128xf32>
    %c0_3 = arith.constant 0 : index
    %c0_4 = arith.constant 0 : index
    %4 = vector.load %arg3[%c0_3, %c0_4] : memref<1x128xf32, #tpu.memory_space<vmem>>, vector<1x128xf32>
    %5 = vector.broadcast %4 : vector<1x128xf32> to vector<256x128xf32>
    %6 = arith.addf %3, %5 : vector<256x128xf32>
    %cst_5 = arith.constant 0.000000e+00 : f32
    %7 = vector.broadcast %cst_5 : f32 to vector<256x128xf32>
    %8 = arith.maximumf %6, %7 : vector<256x128xf32>
    %9 = arith.truncf %8 : vector<256x128xf32> to vector<256x128xbf16>
    %c0_6 = arith.constant 0 : index
    %c0_7 = arith.constant 0 : index
    %10 = vector.load %arg4[%c0_6, %c0_7] : memref<128x128xbf16, #tpu.memory_space<vmem>>, vector<128x128xbf16>
    %cst_8 = arith.constant dense<0.000000e+00> : vector<256x128xf32>
    %11 = tpu.matmul %9, %10, %cst_8 {dimension_numbers = #tpu.dot_dimension_numbers<[1], [0], [0], [1], [0, 0, 1, 1], [], []>} : vector<256x128xbf16>, vector<128x128xbf16>, vector<256x128xf32> -> vector<256x128xf32>
    %c0_9 = arith.constant 0 : index
    %c0_10 = arith.constant 0 : index
    %12 = vector.load %arg5[%c0_9, %c0_10] : memref<1x128xf32, #tpu.memory_space<vmem>>, vector<1x128xf32>
    %13 = vector.broadcast %12 : vector<1x128xf32> to vector<256x128xf32>
    %14 = arith.addf %11, %13 : vector<256x128xf32>
    %15 = arith.truncf %14 : vector<256x128xf32> to vector<256x128xbf16>
    %c0_11 = arith.constant 0 : index
    %c0_12 = arith.constant 0 : index
    %16 = vector.load %arg6[%c0_11, %c0_12] : memref<256x128xbf16, #tpu.memory_space<vmem>>, vector<256x128xbf16>
    tpu.vector_store %arg6[%c0_11, %c0_12], %15 {strides = array<i32>} : memref<256x128xbf16, #tpu.memory_space<vmem>>, vector<256x128xbf16>,
    return
  }
  func.func @transform_0(%arg0: i32) -> (i32, i32) {
    %c0_i32 = arith.constant 0 : i32
    %c0_i32_0 = arith.constant 0 : i32
    return %arg0, %c0_i32 : i32, i32
  }
  func.func @transform_1(%arg0: i32) -> (i32, i32) {
    %c0_i32 = arith.constant 0 : i32
    %c0_i32_0 = arith.constant 0 : i32
    %c0_i32_1 = arith.constant 0 : i32
    return %c0_i32, %c0_i32_0 : i32, i32
  }
  func.func @transform_2(%arg0: i32) -> (i32, i32) {
    %c0_i32 = arith.constant 0 : i32
    %c0_i32_0 = arith.constant 0 : i32
    %c0_i32_1 = arith.constant 0 : i32
    return %c0_i32, %c0_i32_0 : i32, i32
  }
  func.func @transform_3(%arg0: i32) -> (i32, i32) {
    %c0_i32 = arith.constant 0 : i32
    %c0_i32_0 = arith.constant 0 : i32
    %c0_i32_1 = arith.constant 0 : i32
    return %c0_i32, %c0_i32_0 : i32, i32
  }
  func.func @transform_4(%arg0: i32) -> (i32, i32) {
    %c0_i32 = arith.constant 0 : i32
    %c0_i32_0 = arith.constant 0 : i32
    %c0_i32_1 = arith.constant 0 : i32
    return %c0_i32, %c0_i32_0 : i32, i32
  }
  func.func @transform_5(%arg0: i32) -> (i32, i32) {
    %c0_i32 = arith.constant 0 : i32
    %c0_i32_0 = arith.constant 0 : i32
    return %arg0, %c0_i32 : i32, i32
  }
}

</mosaic_0001>

<llo_original>
// kernel: tpu_custom_call.1
$region0: #{tpu_custom_call.1}
  #allocation0 [shape = 'u32[]', space=smem, size = 0x4, offset = 0x4, fixed_abs, tag = 'smem constant byte address 0x4 - core index']
  #allocation1 [shape = 'u32[72,128]{1,0:T(1,128)}', space=vmem, size = 0x9000, scoped, tag = 'internal scratch']
  %s0 = inlined_call_operand.hbm [shape: f32[256,256], index: 0, kind: input, shape index: {}]
  %s1 = inlined_call_operand.hbm [shape: bf16[256,128], index: 1, kind: input, shape index: {}]
  %s2 = inlined_call_operand.vmem [shape: f32[1,128], index: 2, kind: input, shape index: {}]
  %s3 = inlined_call_operand.hbm [shape: bf16[128,128], index: 3, kind: input, shape index: {}]
  %s4 = inlined_call_operand.vmem [shape: f32[1,128], index: 4, kind: input, shape index: {}]
  %s5 = inlined_call_operand.hbm [shape: bf16[256,128], index: 5, kind: output, shape index: {}]
  %s6 = sld [smem:[#allocation0]]
  $region42: #{tpu_custom_call.1} parent=0
    _
  %s8 = ssub.s32 1, %s6
  %s9 = scalar_select 0, %s8, %s6
  $region1: #{tpu_custom_call.1} parent=0
    #allocation2 [shape = 'u8[262144]{0}', space=vmem, size = 0x40000, scoped, tag = 'input window, operand 0, single buffered']
    #allocation3 [shape = 's32[1]{0}', space=sflag, size = 0x4, scoped, tag = 'scoped memory for tpu_custom_call.1']
    #allocation4 [shape = 's32[1]{0}', space=sflag, size = 0x4, scoped, tag = 'scoped memory for tpu_custom_call.1']
    #allocation5 [shape = 'u8[65536]{0}', space=vmem, size = 0x10000, scoped, tag = 'input window, operand 1, single buffered']
    #allocation6 [shape = 's32[1]{0}', space=sflag, size = 0x4, scoped, tag = 'scoped memory for tpu_custom_call.1']
    #allocation7 [shape = 'u8[32768]{0}', space=vmem, size = 0x8000, scoped, tag = 'input window, operand 3, single buffered']
    #allocation8 [shape = 'u8[65536]{0}', space=vmem, size = 0x10000, scoped, tag = 'output window, operand 0, single buffered']
    %10 = vsyncpa [#allocation3], 0
    %11 = vsyncpa [#allocation6], 0
    %12 = vsyncpa [#allocation4], 0
    // Predicated region
    $region2: #{tpu_custom_call.1} parent=1 // pred_check
      _
    $region3: #{tpu_custom_call.1} parent=1 // pred_check_branch
      %14 = sbr.rel (0) target = $region5
    $region4: #{tpu_custom_call.1} parent=1 // pred_region
      %16 = vsyncadd [#allocation3], 0
      %s17 = sshll.u32 %s0, 4
      %s18 = int_to_ptr.hbm [resolvable:$true] %s17
      %s19 = sshll.u32 [#allocation2], 4
      %s20 = int_to_ptr.vmem [resolvable:$true] %s19
      %25 = dma.hbm_to_vmem [thread:$0]  %s18, 8192, %s20, [#allocation3], 256, 256, 16
    $region5: #{tpu_custom_call.1} parent=1 // pred_fallthru
      _
    // Predicated region
    $region6: #{tpu_custom_call.1} parent=1 // pred_check
      _
    $region7: #{tpu_custom_call.1} parent=1 // pred_check_branch
      %27 = sbr.rel (0) target = $region9
    $region8: #{tpu_custom_call.1} parent=1 // pred_region
      %29 = vsyncadd [#allocation6], 0
      %s30 = sshll.u32 %s1, 4
      %s31 = int_to_ptr.hbm [resolvable:$true] %s30
      %s32 = sshll.u32 [#allocation5], 4
      %s33 = int_to_ptr.vmem [resolvable:$true] %s32
      %38 = dma.hbm_to_vmem [thread:$0]  %s31, 2048, %s33, [#allocation6], 64, 64, 4
    $region9: #{tpu_custom_call.1} parent=1 // pred_fallthru
      _
    // Predicated region
    $region10: #{tpu_custom_call.1} parent=1 // pred_check
      _
    $region11: #{tpu_custom_call.1} parent=1 // pred_check_branch
      %40 = sbr.rel (0) target = $region13
    $region12: #{tpu_custom_call.1} parent=1 // pred_region
      _
    $region13: #{tpu_custom_call.1} parent=1 // pred_fallthru
      _
    // Predicated region
    $region14: #{tpu_custom_call.1} parent=1 // pred_check
      _
    $region15: #{tpu_custom_call.1} parent=1 // pred_check_branch
      %42 = sbr.rel (0) target = $region17
    $region16: #{tpu_custom_call.1} parent=1 // pred_region
      %44 = vsyncadd [#allocation6], 0
      %s45 = sshll.u32 %s3, 4
      %s46 = int_to_ptr.hbm [resolvable:$true] %s45
      %s47 = sshll.u32 [#allocation7], 4
      %s48 = int_to_ptr.vmem [resolvable:$true] %s47
      %53 = dma.hbm_to_vmem [thread:$0]  %s46, 1024, %s48, [#allocation6], 64, 64, 4
    $region17: #{tpu_custom_call.1} parent=1 // pred_fallthru
      _
    // Predicated region
    $region18: #{tpu_custom_call.1} parent=1 // pred_check
      _
    $region19: #{tpu_custom_call.1} parent=1 // pred_check_branch
      %55 = sbr.rel (0) target = $region21
    $region20: #{tpu_custom_call.1} parent=1 // pred_region
      _
    $region21: #{tpu_custom_call.1} parent=1 // pred_fallthru
      _
    // Predicated region
    $region22: #{tpu_custom_call.1} parent=1 // pred_check
      _
    $region23: #{tpu_custom_call.1} parent=1 // pred_check_branch
      %57 = sbr.rel (0) target = $region25
    $region24: #{tpu_custom_call.1} parent=1 // pred_region
      %59 = dma.done [#allocation3], 8192
    $region25: #{tpu_custom_call.1} parent=1 // pred_fallthru
      _
    // Predicated region
    $region26: #{tpu_custom_call.1} parent=1 // pred_check
      _
    $region27: #{tpu_custom_call.1} parent=1 // pred_check_branch
      %61 = sbr.rel (0) target = $region29
    $region28: #{tpu_custom_call.1} parent=1 // pred_region
      %63 = dma.done [#allocation6], 2048
    $region29: #{tpu_custom_call.1} parent=1 // pred_fallthru
      _
    // Predicated region
    $region30: #{tpu_custom_call.1} parent=1 // pred_check
      _
    $region31: #{tpu_custom_call.1} parent=1 // pred_check_branch
      %65 = sbr.rel (0) target = $region33
    $region32: #{tpu_custom_call.1} parent=1 // pred_region
      %67 = dma.done [#allocation6], 1024
    $region33: #{tpu_custom_call.1} parent=1 // pred_fallthru
      _
    %v68 = vld [vmem:[#allocation2] sm:$0xff]
    %v69 = vld [vmem:[#allocation2 + $0x8] sm:$0xff]
    %v70 = vld [vmem:[#allocation2 + $0x10] sm:$0xff]
    %v71 = vld [vmem:[#allocation2 + $0x18] sm:$0xff]
    %v72 = vld [vmem:[#allocation2 + $0x20] sm:$0xff]
    %v73 = vld [vmem:[#allocation2 + $0x28] sm:$0xff]
    %v74 = vld [vmem:[#allocation2 + $0x30] sm:$0xff]
    %v75 = vld [vmem:[#allocation2 + $0x38] sm:$0xff]
    %v76 = vld [vmem:[#allocation2 + $0x40] sm:$0xff]
    %v77 = vld [vmem:[#allocation2 + $0x48] sm:$0xff]
    %v78 = vld [vmem:[#allocation2 + $0x50] sm:$0xff]
    %v79 = vld [vmem:[#allocation2 + $0x58] sm:$0xff]
    %v80 = vld [vmem:[#allocation2 + $0x60] sm:$0xff]
    %v81 = vld [vmem:[#allocation2 + $0x68] sm:$0xff]
    %v82 = vld [vmem:[#allocation2 + $0x70] sm:$0xff]
    %v83 = vld [vmem:[#allocation2 + $0x78] sm:$0xff]
    %v84 = vld [vmem:[#allocation2 + $0x80] sm:$0xff]
    %v85 = vld [vmem:[#allocation2 + $0x88] sm:$0xff]
    %v86 = vld [vmem:[#allocation2 + $0x90] sm:$0xff]
    %v87 = vld [vmem:[#allocation2 + $0x98] sm:$0xff]
    %v88 = vld [vmem:[#allocation2 + $0xa0] sm:$0xff]
    %v89 = vld [vmem:[#allocation2 + $0xa8] sm:$0xff]
    %v90 = vld [vmem:[#allocation2 + $0xb0] sm:$0xff]
    %v91 = vld [vmem:[#allocation2 + $0xb8] sm:$0xff]
    %v92 = vld [vmem:[#allocation2 + $0xc0] sm:$0xff]
    %v93 = vld [vmem:[#allocation2 + $0xc8] sm:$0xff]
    %v94 = vld [vmem:[#allocation2 + $0xd0] sm:$0xff]
    %v95 = vld [vmem:[#allocation2 + $0xd8] sm:$0xff]
    %v96 = vld [vmem:[#allocation2 + $0xe0] sm:$0xff]
    %v97 = vld [vmem:[#allocation2 + $0xe8] sm:$0xff]
    %v98 = vld [vmem:[#allocation2 + $0xf0] sm:$0xff]
    %v99 = vld [vmem:[#allocation2 + $0xf8] sm:$0xff]
    %v100 = vld [vmem:[#allocation2 + $0x100] sm:$0xff]
    %v101 = vld [vmem:[#allocation2 + $0x108] sm:$0xff]
    %v102 = vld [vmem:[#allocation2 + $0x110] sm:$0xff]
    %v103 = vld [vmem:[#allocation2 + $0x118] sm:$0xff]
    %v104 = vld [vmem:[#allocation2 + $0x120] sm:$0xff]
    %v105 = vld [vmem:[#allocation2 + $0x128] sm:$0xff]
    %v106 = vld [vmem:[#allocation2 + $0x130] sm:$0xff]
    %v107 = vld [vmem:[#allocation2 + $0x138] sm:$0xff]
    %v108 = vld [vmem:[#allocation2 + $0x140] sm:$0xff]
    %v109 = vld [vmem:[#allocation2 + $0x148] sm:$0xff]
    %v110 = vld [vmem:[#allocation2 + $0x150] sm:$0xff]
    %v111 = vld [vmem:[#allocation2 + $0x158] sm:$0xff]
    %v112 = vld [vmem:[#allocation2 + $0x160] sm:$0xff]
    %v113 = vld [vmem:[#allocation2 + $0x168] sm:$0xff]
    %v114 = vld [vmem:[#allocation2 + $0x170] sm:$0xff]
    %v115 = vld [vmem:[#allocation2 + $0x178] sm:$0xff]
    %v116 = vld [vmem:[#allocation2 + $0x180] sm:$0xff]
    %v117 = vld [vmem:[#allocation2 + $0x188] sm:$0xff]
    %v118 = vld [vmem:[#allocation2 + $0x190] sm:$0xff]
    %v119 = vld [vmem:[#allocation2 + $0x198] sm:$0xff]
    %v120 = vld [vmem:[#allocation2 + $0x1a0] sm:$0xff]
    %v121 = vld [vmem:[#allocation2 + $0x1a8] sm:$0xff]
    %v122 = vld [vmem:[#allocation2 + $0x1b0] sm:$0xff]
    %v123 = vld [vmem:[#allocation2 + $0x1b8] sm:$0xff]
    %v124 = vld [vmem:[#allocation2 + $0x1c0] sm:$0xff]
    %v125 = vld [vmem:[#allocation2 + $0x1c8] sm:$0xff]
    %v126 = vld [vmem:[#allocation2 + $0x1d0] sm:$0xff]
    %v127 = vld [vmem:[#allocation2 + $0x1d8] sm:$0xff]
    %v128 = vld [vmem:[#allocation2 + $0x1e0] sm:$0xff]
    %v129 = vld [vmem:[#allocation2 + $0x1e8] sm:$0xff]
    %v130 = vld [vmem:[#allocation2 + $0x1f0] sm:$0xff]
    %v131 = vld [vmem:[#allocation2 + $0x1f8] sm:$0xff]
    %v132 = vpack.c.bf16 %v70, %v68
    %v133 = vpack.c.bf16 %v71, %v69
    %v134 = vpack.c.bf16 %v74, %v72
    %v135 = vpack.c.bf16 %v75, %v73
    %v136 = vpack.c.bf16 %v78, %v76
    %v137 = vpack.c.bf16 %v79, %v77
    %v138 = vpack.c.bf16 %v82, %v80
    %v139 = vpack.c.bf16 %v83, %v81
    %v140 = vpack.c.bf16 %v86, %v84
    %v141 = vpack.c.bf16 %v87, %v85
    %v142 = vpack.c.bf16 %v90, %v88
    %v143 = vpack.c.bf16 %v91, %v89
    %v144 = vpack.c.bf16 %v94, %v92
    %v145 = vpack.c.bf16 %v95, %v93
    %v146 = vpack.c.bf16 %v98, %v96
    %v147 = vpack.c.bf16 %v99, %v97
    %v148 = vpack.c.bf16 %v102, %v100
    %v149 = vpack.c.bf16 %v103, %v101
    %v150 = vpack.c.bf16 %v106, %v104
    %v151 = vpack.c.bf16 %v107, %v105
    %v152 = vpack.c.bf16 %v110, %v108
    %v153 = vpack.c.bf16 %v111, %v109
    %v154 = vpack.c.bf16 %v114, %v112
    %v155 = vpack.c.bf16 %v115, %v113
    %v156 = vpack.c.bf16 %v118, %v116
    %v157 = vpack.c.bf16 %v119, %v117
    %v158 = vpack.c.bf16 %v122, %v120
    %v159 = vpack.c.bf16 %v123, %v121
    %v160 = vpack.c.bf16 %v126, %v124
    %v161 = vpack.c.bf16 %v127, %v125
    %v162 = vpack.c.bf16 %v130, %v128
    %v163 = vpack.c.bf16 %v131, %v129
    %v164 = vld [vmem:[#allocation5] sm:$0xf]
    %v165 = vld [vmem:[#allocation5 + $0x4] sm:$0xf]
    %v166 = vld [vmem:[#allocation5 + $0x8] sm:$0xf]
    %v167 = vld [vmem:[#allocation5 + $0xc] sm:$0xf]
    %v168 = vld [vmem:[#allocation5 + $0x10] sm:$0xf]
    %v169 = vld [vmem:[#allocation5 + $0x14] sm:$0xf]
    %v170 = vld [vmem:[#allocation5 + $0x18] sm:$0xf]
    %v171 = vld [vmem:[#allocation5 + $0x1c] sm:$0xf]
    %v172 = vld [vmem:[#allocation5 + $0x20] sm:$0xf]
    %v173 = vld [vmem:[#allocation5 + $0x24] sm:$0xf]
    %v174 = vld [vmem:[#allocation5 + $0x28] sm:$0xf]
    %v175 = vld [vmem:[#allocation5 + $0x2c] sm:$0xf]
    %v176 = vld [vmem:[#allocation5 + $0x30] sm:$0xf]
    %v177 = vld [vmem:[#allocation5 + $0x34] sm:$0xf]
    %v178 = vld [vmem:[#allocation5 + $0x38] sm:$0xf]
    %v179 = vld [vmem:[#allocation5 + $0x3c] sm:$0xf]
    %v180 = vld [vmem:[#allocation5 + $0x40] sm:$0xf]
    %v181 = vld [vmem:[#allocation5 + $0x44] sm:$0xf]
    %v182 = vld [vmem:[#allocation5 + $0x48] sm:$0xf]
    %v183 = vld [vmem:[#allocation5 + $0x4c] sm:$0xf]
    %v184 = vld [vmem:[#allocation5 + $0x50] sm:$0xf]
    %v185 = vld [vmem:[#allocation5 + $0x54] sm:$0xf]
    %v186 = vld [vmem:[#allocation5 + $0x58] sm:$0xf]
    %v187 = vld [vmem:[#allocation5 + $0x5c] sm:$0xf]
    %v188 = vld [vmem:[#allocation5 + $0x60] sm:$0xf]
    %v189 = vld [vmem:[#allocation5 + $0x64] sm:$0xf]
    %v190 = vld [vmem:[#allocation5 + $0x68] sm:$0xf]
    %v191 = vld [vmem:[#allocation5 + $0x6c] sm:$0xf]
    %v192 = vld [vmem:[#allocation5 + $0x70] sm:$0xf]
    %v193 = vld [vmem:[#allocation5 + $0x74] sm:$0xf]
    %v194 = vld [vmem:[#allocation5 + $0x78] sm:$0xf]
    %v195 = vld [vmem:[#allocation5 + $0x7c] sm:$0xf]
    %v196 = vld [vmem:[%s2] sm:$0x1]
    %v198 = vperm.slane %v196, 0
    %v232 = vunpack.c.l.b16 %v164
    %v233 = vunpack.c.l.b16 %v165
    %v234 = vunpack.c.l.b16 %v166
    %v235 = vunpack.c.l.b16 %v167
    %v236 = vunpack.c.l.b16 %v168
    %v237 = vunpack.c.l.b16 %v169
    %v238 = vunpack.c.l.b16 %v170
    %v239 = vunpack.c.l.b16 %v171
    %v240 = vunpack.c.l.b16 %v172
    %v241 = vunpack.c.l.b16 %v173
    %v242 = vunpack.c.l.b16 %v174
    %v243 = vunpack.c.l.b16 %v175
    %v244 = vunpack.c.l.b16 %v176
    %v245 = vunpack.c.l.b16 %v177
    %v246 = vunpack.c.l.b16 %v178
    %v247 = vunpack.c.l.b16 %v179
    %v248 = vunpack.c.l.b16 %v180
    %v249 = vunpack.c.l.b16 %v181
    %v250 = vunpack.c.l.b16 %v182
    %v251 = vunpack.c.l.b16 %v183
    %v252 = vunpack.c.l.b16 %v184
    %v253 = vunpack.c.l.b16 %v185
    %v254 = vunpack.c.l.b16 %v186
    %v255 = vunpack.c.l.b16 %v187
    %v256 = vunpack.c.l.b16 %v188
    %v257 = vunpack.c.l.b16 %v189
    %v258 = vunpack.c.l.b16 %v190
    %v259 = vunpack.c.l.b16 %v191
    %v260 = vunpack.c.l.b16 %v192
    %v261 = vunpack.c.l.b16 %v193
    %v262 = vunpack.c.l.b16 %v194
    %v263 = vunpack.c.l.b16 %v195
    %v264 = vpack.c.b16 %v233, %v232
    %v265 = vpack.c.b16 %v235, %v234
    %v266 = vpack.c.b16 %v237, %v236
    %v267 = vpack.c.b16 %v239, %v238
    %v268 = vpack.c.b16 %v241, %v240
    %v269 = vpack.c.b16 %v243, %v242
    %v270 = vpack.c.b16 %v245, %v244
    %v271 = vpack.c.b16 %v247, %v246
    %v272 = vpack.c.b16 %v249, %v248
    %v273 = vpack.c.b16 %v251, %v250
    %v274 = vpack.c.b16 %v253, %v252
    %v275 = vpack.c.b16 %v255, %v254
    %v276 = vpack.c.b16 %v257, %v256
    %v277 = vpack.c.b16 %v259, %v258
    %v278 = vpack.c.b16 %v261, %v260
    %v279 = vpack.c.b16 %v263, %v262
    %296 = vmatpush.bf16.msra.mxu0 %v271
    %297 = vmatpush.bf16.msra.mxu0 %v270
    %298 = vmatpush.bf16.msra.mxu0 %v269
    %299 = vmatpush.bf16.msra.mxu0 %v268
    %300 = vmatpush.bf16.msra.mxu0 %v267
    %301 = vmatpush.bf16.msra.mxu0 %v266
    %302 = vmatpush.bf16.msra.mxu0 %v265
    %303 = vmatpush.bf16.msra.mxu0 %v264
    %304 = vmatmul.bf16.gmra.mxu0 %v132
    %v305 = vpop.f32.mrf.mxu0
    %v306 = vadd.f32 %v198, %v305
    %v307 = vpop.f32.mrf.mxu0
    %v308 = vadd.f32 %v198, %v307
    %309 = vmatmul.bf16.gmra.mxu0 %v134
    %v310 = vpop.f32.mrf.mxu0
    %v311 = vadd.f32 %v198, %v310
    %v312 = vpop.f32.mrf.mxu0
    %v313 = vadd.f32 %v198, %v312
    %314 = vmatmul.bf16.gmra.mxu0 %v136
    %v315 = vpop.f32.mrf.mxu0
    %v316 = vadd.f32 %v198, %v315
    %v317 = vpop.f32.mrf.mxu0
    %v318 = vadd.f32 %v198, %v317
    %319 = vmatmul.bf16.gmra.mxu0 %v138
    %v320 = vpop.f32.mrf.mxu0
    %v321 = vadd.f32 %v198, %v320
    %v322 = vpop.f32.mrf.mxu0
    %v323 = vadd.f32 %v198, %v322
    %324 = vmatmul.bf16.gmra.mxu0 %v140
    %v325 = vpop.f32.mrf.mxu0
    %v326 = vadd.f32 %v198, %v325
    %v327 = vpop.f32.mrf.mxu0
    %v328 = vadd.f32 %v198, %v327
    %329 = vmatmul.bf16.gmra.mxu0 %v142
    %v330 = vpop.f32.mrf.mxu0
    %v331 = vadd.f32 %v198, %v330
    %v332 = vpop.f32.mrf.mxu0
    %v333 = vadd.f32 %v198, %v332
    %334 = vmatmul.bf16.gmra.mxu0 %v144
    %v335 = vpop.f32.mrf.mxu0
    %v336 = vadd.f32 %v198, %v335
    %v337 = vpop.f32.mrf.mxu0
    %v338 = vadd.f32 %v198, %v337
    %339 = vmatmul.bf16.gmra.mxu0 %v146
    %v340 = vpop.f32.mrf.mxu0
    %v341 = vadd.f32 %v198, %v340
    %v342 = vpop.f32.mrf.mxu0
    %v343 = vadd.f32 %v198, %v342
    %344 = vmatmul.bf16.gmra.mxu0 %v148
    %v345 = vpop.f32.mrf.mxu0
    %v346 = vadd.f32 %v198, %v345
    %v347 = vpop.f32.mrf.mxu0
    %v348 = vadd.f32 %v198, %v347
    %349 = vmatmul.bf16.gmra.mxu0 %v150
    %v350 = vpop.f32.mrf.mxu0
    %v351 = vadd.f32 %v198, %v350
    %v352 = vpop.f32.mrf.mxu0
    %v353 = vadd.f32 %v198, %v352
    %354 = vmatmul.bf16.gmra.mxu0 %v152
    %v355 = vpop.f32.mrf.mxu0
    %v356 = vadd.f32 %v198, %v355
    %v357 = vpop.f32.mrf.mxu0
    %v358 = vadd.f32 %v198, %v357
    %359 = vmatmul.bf16.gmra.mxu0 %v154
    %v360 = vpop.f32.mrf.mxu0
    %v361 = vadd.f32 %v198, %v360
    %v362 = vpop.f32.mrf.mxu0
    %v363 = vadd.f32 %v198, %v362
    %364 = vmatmul.bf16.gmra.mxu0 %v156
    %v365 = vpop.f32.mrf.mxu0
    %v366 = vadd.f32 %v198, %v365
    %v367 = vpop.f32.mrf.mxu0
    %v368 = vadd.f32 %v198, %v367
    %369 = vmatmul.bf16.gmra.mxu0 %v158
    %v370 = vpop.f32.mrf.mxu0
    %v371 = vadd.f32 %v198, %v370
    %v372 = vpop.f32.mrf.mxu0
    %v373 = vadd.f32 %v198, %v372
    %374 = vmatmul.bf16.gmra.mxu0 %v160
    %v375 = vpop.f32.mrf.mxu0
    %v376 = vadd.f32 %v198, %v375
    %v377 = vpop.f32.mrf.mxu0
    %v378 = vadd.f32 %v198, %v377
    %379 = vmatmul.bf16.gmra.mxu0 %v162
    %v380 = vpop.f32.mrf.mxu0
    %v381 = vadd.f32 %v198, %v380
    %v382 = vpop.f32.mrf.mxu0
    %v383 = vadd.f32 %v198, %v382
    %384 = vdwg.mxu0
    %385 = vmatpush.bf16.msra.mxu0 %v279
    %386 = vmatpush.bf16.msra.mxu0 %v278
    %387 = vmatpush.bf16.msra.mxu0 %v277
    %388 = vmatpush.bf16.msra.mxu0 %v276
    %389 = vmatpush.bf16.msra.mxu0 %v275
    %390 = vmatpush.bf16.msra.mxu0 %v274
    %391 = vmatpush.bf16.msra.mxu0 %v273
    %392 = vmatpush.bf16.msra.mxu0 %v272
    %393 = vmatmul.bf16.gmra.mxu0 %v133
    %v394 = vpop.f32.mrf.mxu0
    %v395 = vadd.f32 %v306, %v394
    %v396 = vpop.f32.mrf.mxu0
    %v397 = vadd.f32 %v308, %v396
    %398 = vmatmul.bf16.gmra.mxu0 %v135
    %v399 = vpop.f32.mrf.mxu0
    %v400 = vadd.f32 %v311, %v399
    %v401 = vpop.f32.mrf.mxu0
    %v402 = vadd.f32 %v313, %v401
    %403 = vmatmul.bf16.gmra.mxu0 %v137
    %v404 = vpop.f32.mrf.mxu0
    %v405 = vadd.f32 %v316, %v404
    %v406 = vpop.f32.mrf.mxu0
    %v407 = vadd.f32 %v318, %v406
    %408 = vmatmul.bf16.gmra.mxu0 %v139
    %v409 = vpop.f32.mrf.mxu0
    %v410 = vadd.f32 %v321, %v409
    %v411 = vpop.f32.mrf.mxu0
    %v412 = vadd.f32 %v323, %v411
    %413 = vmatmul.bf16.gmra.mxu0 %v141
    %v414 = vpop.f32.mrf.mxu0
    %v415 = vadd.f32 %v326, %v414
    %v416 = vpop.f32.mrf.mxu0
    %v417 = vadd.f32 %v328, %v416
    %418 = vmatmul.bf16.gmra.mxu0 %v143
    %v419 = vpop.f32.mrf.mxu0
    %v420 = vadd.f32 %v331, %v419
    %v421 = vpop.f32.mrf.mxu0
    %v422 = vadd.f32 %v333, %v421
    %423 = vmatmul.bf16.gmra.mxu0 %v145
    %v424 = vpop.f32.mrf.mxu0
    %v425 = vadd.f32 %v336, %v424
    %v426 = vpop.f32.mrf.mxu0
    %v427 = vadd.f32 %v338, %v426
    %428 = vmatmul.bf16.gmra.mxu0 %v147
    %v429 = vpop.f32.mrf.mxu0
    %v430 = vadd.f32 %v341, %v429
    %v431 = vpop.f32.mrf.mxu0
    %v432 = vadd.f32 %v343, %v431
    %433 = vmatmul.bf16.gmra.mxu0 %v149
    %v434 = vpop.f32.mrf.mxu0
    %v435 = vadd.f32 %v346, %v434
    %v436 = vpop.f32.mrf.mxu0
    %v437 = vadd.f32 %v348, %v436
    %438 = vmatmul.bf16.gmra.mxu0 %v151
    %v439 = vpop.f32.mrf.mxu0
    %v440 = vadd.f32 %v351, %v439
    %v441 = vpop.f32.mrf.mxu0
    %v442 = vadd.f32 %v353, %v441
    %443 = vmatmul.bf16.gmra.mxu0 %v153
    %v444 = vpop.f32.mrf.mxu0
    %v445 = vadd.f32 %v356, %v444
    %v446 = vpop.f32.mrf.mxu0
    %v447 = vadd.f32 %v358, %v446
    %448 = vmatmul.bf16.gmra.mxu0 %v155
    %v449 = vpop.f32.mrf.mxu0
    %v450 = vadd.f32 %v361, %v449
    %v451 = vpop.f32.mrf.mxu0
    %v452 = vadd.f32 %v363, %v451
    %453 = vmatmul.bf16.gmra.mxu0 %v157
    %v454 = vpop.f32.mrf.mxu0
    %v455 = vadd.f32 %v366, %v454
    %v456 = vpop.f32.mrf.mxu0
    %v457 = vadd.f32 %v368, %v456
    %458 = vmatmul.bf16.gmra.mxu0 %v159
    %v459 = vpop.f32.mrf.mxu0
    %v460 = vadd.f32 %v371, %v459
    %v461 = vpop.f32.mrf.mxu0
    %v462 = vadd.f32 %v373, %v461
    %463 = vmatmul.bf16.gmra.mxu0 %v161
    %v464 = vpop.f32.mrf.mxu0
    %v465 = vadd.f32 %v376, %v464
    %v466 = vpop.f32.mrf.mxu0
    %v467 = vadd.f32 %v378, %v466
    %468 = vmatmul.bf16.gmra.mxu0 %v163
    %v469 = vpop.f32.mrf.mxu0
    %v470 = vadd.f32 %v381, %v469
    %v471 = vpop.f32.mrf.mxu0
    %v472 = vadd.f32 %v383, %v471
    %473 = vdwg.mxu0
    %v474 = vmax.f32 %v395, 0.0
    %v475 = vmax.f32 %v397, 0.0
    %v476 = vmax.f32 %v400, 0.0
    %v477 = vmax.f32 %v402, 0.0
    %v478 = vmax.f32 %v405, 0.0
    %v479 = vmax.f32 %v407, 0.0
    %v480 = vmax.f32 %v410, 0.0
    %v481 = vmax.f32 %v412, 0.0
    %v482 = vmax.f32 %v415, 0.0
    %v483 = vmax.f32 %v417, 0.0
    %v484 = vmax.f32 %v420, 0.0
    %v485 = vmax.f32 %v422, 0.0
    %v486 = vmax.f32 %v425, 0.0
    %v487 = vmax.f32 %v427, 0.0
    %v488 = vmax.f32 %v430, 0.0
    %v489 = vmax.f32 %v432, 0.0
    %v490 = vmax.f32 %v435, 0.0
    %v491 = vmax.f32 %v437, 0.0
    %v492 = vmax.f32 %v440, 0.0
    %v493 = vmax.f32 %v442, 0.0
    %v494 = vmax.f32 %v445, 0.0
    %v495 = vmax.f32 %v447, 0.0
    %v496 = vmax.f32 %v450, 0.0
    %v497 = vmax.f32 %v452, 0.0
    %v498 = vmax.f32 %v455, 0.0
    %v499 = vmax.f32 %v457, 0.0
    %v500 = vmax.f32 %v460, 0.0
    %v501 = vmax.f32 %v462, 0.0
    %v502 = vmax.f32 %v465, 0.0
    %v503 = vmax.f32 %v467, 0.0
    %v504 = vmax.f32 %v470, 0.0
    %v505 = vmax.f32 %v472, 0.0
    %v506 = vpack.c.bf16 %v475, %v474
    %v507 = vpack.c.bf16 %v477, %v476
    %v508 = vpack.c.bf16 %v479, %v478
    %v509 = vpack.c.bf16 %v481, %v480
    %v510 = vpack.c.bf16 %v483, %v482
    %v511 = vpack.c.bf16 %v485, %v484
    %v512 = vpack.c.bf16 %v487, %v486
    %v513 = vpack.c.bf16 %v489, %v488
    %v514 = vpack.c.bf16 %v491, %v490
    %v515 = vpack.c.bf16 %v493, %v492
    %v516 = vpack.c.bf16 %v495, %v494
    %v517 = vpack.c.bf16 %v497, %v496
    %v518 = vpack.c.bf16 %v499, %v498
    %v519 = vpack.c.bf16 %v501, %v500
    %v520 = vpack.c.bf16 %v503, %v502
    %v521 = vpack.c.bf16 %v505, %v504
    %v522 = vld [vmem:[#allocation7] sm:$0xf]
    %v523 = vld [vmem:[#allocation7 + $0x4] sm:$0xf]
    %v524 = vld [vmem:[#allocation7 + $0x8] sm:$0xf]
    %v525 = vld [vmem:[#allocation7 + $0xc] sm:$0xf]
    %v526 = vld [vmem:[#allocation7 + $0x10] sm:$0xf]
    %v527 = vld [vmem:[#allocation7 + $0x14] sm:$0xf]
    %v528 = vld [vmem:[#allocation7 + $0x18] sm:$0xf]
    %v529 = vld [vmem:[#allocation7 + $0x1c] sm:$0xf]
    %v530 = vld [vmem:[#allocation7 + $0x20] sm:$0xf]
    %v531 = vld [vmem:[#allocation7 + $0x24] sm:$0xf]
    %v532 = vld [vmem:[#allocation7 + $0x28] sm:$0xf]
    %v533 = vld [vmem:[#allocation7 + $0x2c] sm:$0xf]
    %v534 = vld [vmem:[#allocation7 + $0x30] sm:$0xf]
    %v535 = vld [vmem:[#allocation7 + $0x34] sm:$0xf]
    %v536 = vld [vmem:[#allocation7 + $0x38] sm:$0xf]
    %v537 = vld [vmem:[#allocation7 + $0x3c] sm:$0xf]
    %v538 = vld [vmem:[%s4] sm:$0x1]
    %v540 = vperm.slane %v538, 0
    %v558 = vunpack.c.l.b16 %v522
    %v559 = vunpack.c.l.b16 %v523
    %v560 = vunpack.c.l.b16 %v524
    %v561 = vunpack.c.l.b16 %v525
    %v562 = vunpack.c.l.b16 %v526
    %v563 = vunpack.c.l.b16 %v527
    %v564 = vunpack.c.l.b16 %v528
    %v565 = vunpack.c.l.b16 %v529
    %v566 = vunpack.c.l.b16 %v530
    %v567 = vunpack.c.l.b16 %v531
    %v568 = vunpack.c.l.b16 %v532
    %v569 = vunpack.c.l.b16 %v533
    %v570 = vunpack.c.l.b16 %v534
    %v571 = vunpack.c.l.b16 %v535
    %v572 = vunpack.c.l.b16 %v536
    %v573 = vunpack.c.l.b16 %v537
    %v574 = vpack.c.b16 %v559, %v558
    %v575 = vpack.c.b16 %v561, %v560
    %v576 = vpack.c.b16 %v563, %v562
    %v577 = vpack.c.b16 %v565, %v564
    %v578 = vpack.c.b16 %v567, %v566
    %v579 = vpack.c.b16 %v569, %v568
    %v580 = vpack.c.b16 %v571, %v570
    %v581 = vpack.c.b16 %v573, %v572
    %590 = vmatpush.bf16.msra.mxu0 %v581
    %591 = vmatpush.bf16.msra.mxu0 %v580
    %592 = vmatpush.bf16.msra.mxu0 %v579
    %593 = vmatpush.bf16.msra.mxu0 %v578
    %594 = vmatpush.bf16.msra.mxu0 %v577
    %595 = vmatpush.bf16.msra.mxu0 %v576
    %596 = vmatpush.bf16.msra.mxu0 %v575
    %597 = vmatpush.bf16.msra.mxu0 %v574
    %598 = vmatmul.bf16.gmra.mxu0 %v506
    %v599 = vpop.f32.mrf.mxu0
    %v600 = vadd.f32 %v540, %v599
    %v601 = vpop.f32.mrf.mxu0
    %v602 = vadd.f32 %v540, %v601
    %603 = vmatmul.bf16.gmra.mxu0 %v507
    %v604 = vpop.f32.mrf.mxu0
    %v605 = vadd.f32 %v540, %v604
    %v606 = vpop.f32.mrf.mxu0
    %v607 = vadd.f32 %v540, %v606
    %608 = vmatmul.bf16.gmra.mxu0 %v508
    %v609 = vpop.f32.mrf.mxu0
    %v610 = vadd.f32 %v540, %v609
    %v611 = vpop.f32.mrf.mxu0
    %v612 = vadd.f32 %v540, %v611
    %613 = vmatmul.bf16.gmra.mxu0 %v509
    %v614 = vpop.f32.mrf.mxu0
    %v615 = vadd.f32 %v540, %v614
    %v616 = vpop.f32.mrf.mxu0
    %v617 = vadd.f32 %v540, %v616
    %618 = vmatmul.bf16.gmra.mxu0 %v510
    %v619 = vpop.f32.mrf.mxu0
    %v620 = vadd.f32 %v540, %v619
    %v621 = vpop.f32.mrf.mxu0
    %v622 = vadd.f32 %v540, %v621
    %623 = vmatmul.bf16.gmra.mxu0 %v511
    %v624 = vpop.f32.mrf.mxu0
    %v625 = vadd.f32 %v540, %v624
    %v626 = vpop.f32.mrf.mxu0
    %v627 = vadd.f32 %v540, %v626
    %628 = vmatmul.bf16.gmra.mxu0 %v512
    %v629 = vpop.f32.mrf.mxu0
    %v630 = vadd.f32 %v540, %v629
    %v631 = vpop.f32.mrf.mxu0
    %v632 = vadd.f32 %v540, %v631
    %633 = vmatmul.bf16.gmra.mxu0 %v513
    %v634 = vpop.f32.mrf.mxu0
    %v635 = vadd.f32 %v540, %v634
    %v636 = vpop.f32.mrf.mxu0
    %v637 = vadd.f32 %v540, %v636
    %638 = vmatmul.bf16.gmra.mxu0 %v514
    %v639 = vpop.f32.mrf.mxu0
    %v640 = vadd.f32 %v540, %v639
    %v641 = vpop.f32.mrf.mxu0
    %v642 = vadd.f32 %v540, %v641
    %643 = vmatmul.bf16.gmra.mxu0 %v515
    %v644 = vpop.f32.mrf.mxu0
    %v645 = vadd.f32 %v540, %v644
    %v646 = vpop.f32.mrf.mxu0
    %v647 = vadd.f32 %v540, %v646
    %648 = vmatmul.bf16.gmra.mxu0 %v516
    %v649 = vpop.f32.mrf.mxu0
    %v650 = vadd.f32 %v540, %v649
    %v651 = vpop.f32.mrf.mxu0
    %v652 = vadd.f32 %v540, %v651
    %653 = vmatmul.bf16.gmra.mxu0 %v517
    %v654 = vpop.f32.mrf.mxu0
    %v655 = vadd.f32 %v540, %v654
    %v656 = vpop.f32.mrf.mxu0
    %v657 = vadd.f32 %v540, %v656
    %658 = vmatmul.bf16.gmra.mxu0 %v518
    %v659 = vpop.f32.mrf.mxu0
    %v660 = vadd.f32 %v540, %v659
    %v661 = vpop.f32.mrf.mxu0
    %v662 = vadd.f32 %v540, %v661
    %663 = vmatmul.bf16.gmra.mxu0 %v519
    %v664 = vpop.f32.mrf.mxu0
    %v665 = vadd.f32 %v540, %v664
    %v666 = vpop.f32.mrf.mxu0
    %v667 = vadd.f32 %v540, %v666
    %668 = vmatmul.bf16.gmra.mxu0 %v520
    %v669 = vpop.f32.mrf.mxu0
    %v670 = vadd.f32 %v540, %v669
    %v671 = vpop.f32.mrf.mxu0
    %v672 = vadd.f32 %v540, %v671
    %673 = vmatmul.bf16.gmra.mxu0 %v521
    %v674 = vpop.f32.mrf.mxu0
    %v675 = vadd.f32 %v540, %v674
    %v676 = vpop.f32.mrf.mxu0
    %v677 = vadd.f32 %v540, %v676
    %678 = vdwg.mxu0
    %v679 = vpack.c.bf16 %v600, %v600
    %v680 = vpack.c.bf16 %v602, %v602
    %v681 = vpack.c.bf16 %v605, %v605
    %v682 = vpack.c.bf16 %v607, %v607
    %v683 = vpack.c.bf16 %v610, %v610
    %v684 = vpack.c.bf16 %v612, %v612
    %v685 = vpack.c.bf16 %v615, %v615
    %v686 = vpack.c.bf16 %v617, %v617
    %v687 = vpack.c.bf16 %v620, %v620
    %v688 = vpack.c.bf16 %v622, %v622
    %v689 = vpack.c.bf16 %v625, %v625
    %v690 = vpack.c.bf16 %v627, %v627
    %v691 = vpack.c.bf16 %v630, %v630
    %v692 = vpack.c.bf16 %v632, %v632
    %v693 = vpack.c.bf16 %v635, %v635
    %v694 = vpack.c.bf16 %v637, %v637
    %v695 = vpack.c.bf16 %v640, %v640
    %v696 = vpack.c.bf16 %v642, %v642
    %v697 = vpack.c.bf16 %v645, %v645
    %v698 = vpack.c.bf16 %v647, %v647
    %v699 = vpack.c.bf16 %v650, %v650
    %v700 = vpack.c.bf16 %v652, %v652
    %v701 = vpack.c.bf16 %v655, %v655
    %v702 = vpack.c.bf16 %v657, %v657
    %v703 = vpack.c.bf16 %v660, %v660
    %v704 = vpack.c.bf16 %v662, %v662
    %v705 = vpack.c.bf16 %v665, %v665
    %v706 = vpack.c.bf16 %v667, %v667
    %v707 = vpack.c.bf16 %v670, %v670
    %v708 = vpack.c.bf16 %v672, %v672
    %v709 = vpack.c.bf16 %v675, %v675
    %v710 = vpack.c.bf16 %v677, %v677
    %711 = vst [vmem:[#allocation8] sm:$0xf] %v679
    %712 = vst [vmem:[#allocation8 + $0x4] sm:$0xf] %v680
    %713 = vst [vmem:[#allocation8 + $0x8] sm:$0xf] %v681
    %714 = vst [vmem:[#allocation8 + $0xc] sm:$0xf] %v682
    %715 = vst [vmem:[#allocation8 + $0x10] sm:$0xf] %v683
    %716 = vst [vmem:[#allocation8 + $0x14] sm:$0xf] %v684
    %717 = vst [vmem:[#allocation8 + $0x18] sm:$0xf] %v685
    %718 = vst [vmem:[#allocation8 + $0x1c] sm:$0xf] %v686
    %719 = vst [vmem:[#allocation8 + $0x20] sm:$0xf] %v687
    %720 = vst [vmem:[#allocation8 + $0x24] sm:$0xf] %v688
    %721 = vst [vmem:[#allocation8 + $0x28] sm:$0xf] %v689
    %722 = vst [vmem:[#allocation8 + $0x2c] sm:$0xf] %v690
    %723 = vst [vmem:[#allocation8 + $0x30] sm:$0xf] %v691
    %724 = vst [vmem:[#allocation8 + $0x34] sm:$0xf] %v692
    %725 = vst [vmem:[#allocation8 + $0x38] sm:$0xf] %v693
    %726 = vst [vmem:[#allocation8 + $0x3c] sm:$0xf] %v694
    %727 = vst [vmem:[#allocation8 + $0x40] sm:$0xf] %v695
    %728 = vst [vmem:[#allocation8 + $0x44] sm:$0xf] %v696
    %729 = vst [vmem:[#allocation8 + $0x48] sm:$0xf] %v697
    %730 = vst [vmem:[#allocation8 + $0x4c] sm:$0xf] %v698
    %731 = vst [vmem:[#allocation8 + $0x50] sm:$0xf] %v699
    %732 = vst [vmem:[#allocation8 + $0x54] sm:$0xf] %v700
    %733 = vst [vmem:[#allocation8 + $0x58] sm:$0xf] %v701
    %734 = vst [vmem:[#allocation8 + $0x5c] sm:$0xf] %v702
    %735 = vst [vmem:[#allocation8 + $0x60] sm:$0xf] %v703
    %736 = vst [vmem:[#allocation8 + $0x64] sm:$0xf] %v704
    %737 = vst [vmem:[#allocation8 + $0x68] sm:$0xf] %v705
    %738 = vst [vmem:[#allocation8 + $0x6c] sm:$0xf] %v706
    %739 = vst [vmem:[#allocation8 + $0x70] sm:$0xf] %v707
    %740 = vst [vmem:[#allocation8 + $0x74] sm:$0xf] %v708
    %741 = vst [vmem:[#allocation8 + $0x78] sm:$0xf] %v709
    %742 = vst [vmem:[#allocation8 + $0x7c] sm:$0xf] %v710
    // Predicated region
    $region34: #{tpu_custom_call.1} parent=1 // pred_check
      _
    $region35: #{tpu_custom_call.1} parent=1 // pred_check_branch
      %744 = sbr.rel (0) target = $region37
    $region36: #{tpu_custom_call.1} parent=1 // pred_region
      %746 = vsyncadd [#allocation4], 0
      %s747 = sshll.u32 [#allocation8], 4
      %s748 = int_to_ptr.vmem [resolvable:$true] %s747
      %s749 = sshll.u32 %s5, 4
      %s750 = int_to_ptr.hbm [resolvable:$true] %s749
      %755 = dma.vmem_to_hbm [thread:$0]  %s748, 2048, %s750, [#allocation4], 64, 64, 4
    $region37: #{tpu_custom_call.1} parent=1 // pred_fallthru
      _
    // Predicated region
    $region38: #{tpu_custom_call.1} parent=1 // pred_check
      _
    $region39: #{tpu_custom_call.1} parent=1 // pred_check_branch
      %757 = sbr.rel (0) target = $region41
    $region40: #{tpu_custom_call.1} parent=1 // pred_region
      %759 = dma.done [#allocation4], 2048
    $region41: #{tpu_custom_call.1} parent=1 // pred_fallthru
      _
    %760 = vsyncpa [#allocation3], 1
    %761 = vsyncpa [#allocation6], 1
    %762 = vsyncpa [#allocation4], 1

</llo_original>
